<compile_context>
chip_gen: v5e
topology: v5e:2x2
jax: 0.10.0
libtpu: 0.0.40
codegen_flags: <defaults>
</compile_context>

<pallas_src>
import jax
import jax.numpy as jnp
from jax.experimental import pallas as pl
from jax.experimental.pallas import tpu as pltpu


# Conservative, generation-agnostic budgets (v5e/v6e: 128 MiB VMEM, v7x: 64 MiB
# per TensorCore; default scoped limits are 16/32/32 MiB respectively).
_VMEM_DATA_BUDGET = 24 * 1024 * 1024   # target footprint for tiles + scratch
_VMEM_LIMIT_BYTES = 48 * 1024 * 1024   # raised scoped limit, < v7x physical
_MAX_TM = 2048                          # amortizes ~0.35us/grid-step overhead
_K_TILE = 1024                          # K tile when input_dim is large
_K_SPLIT = 2048                         # split K only above this input_dim


def _round_up(x, m):
    return (x + m - 1) // m * m


def _vae_encoder_kernel(x_ref, w_ref, b_ref, o_ref, acc_ref):
    """acc += x @ W (f32 accumulation); bias + ReLU + store on the last K step."""
    k = pl.program_id(1)

    @pl.when(k == 0)
    def _():
        acc_ref[...] = jnp.zeros_like(acc_ref)

    acc_ref[...] += jnp.dot(x_ref[...], w_ref[...],
                            preferred_element_type=jnp.float32)

    @pl.when(k == pl.num_programs(1) - 1)
    def _():
        y = acc_ref[...] + b_ref[...]                  # f32 epilogue
        o_ref[...] = jnp.maximum(y, 0.0).astype(o_ref.dtype)


def fuse_vae_encoder_params(w_mu, b_mu, w_var, b_var,
                            *, compute_dtype=jnp.bfloat16):
    """One-time fusion of the two Linear heads. Call at init, NOT per forward.

    Returns (w_fused, b_fused, half):
      w_fused : (d_pad, out_width) in compute_dtype  (zero padded)
      b_fused : (1, out_width) float32               (zero padded)
      half    : output_dim // 2
    """
    d, half = w_mu.shape
    out_cols = 2 * half
    # Lane-dense output: pad fused columns up to a multiple of 128 so stores
    # are unmasked. TODO(synk): for 2*half << 128 the padded writeback
    # dominates output HBM traffic; consider masked stores / bf16 output there.
    out_width = _round_up(max(out_cols, 128), 128)
    # K-tiling: for large input_dim, pad rows to a multiple of the K tile.
    tk = d if d <= _K_SPLIT else _K_TILE
    d_pad = _round_up(d, tk)

    w = jnp.concatenate([w_mu, w_var], axis=1)
    w = jnp.pad(w, ((0, d_pad - d), (0, out_width - out_cols)))
    w = w.astype(compute_dtype)
    b = jnp.concatenate([b_mu, b_var], axis=0).reshape(1, out_cols)
    b = jnp.pad(b, ((0, 0), (0, out_width - out_cols))).astype(jnp.float32)
    return w, b, half


def vae_encoder_forward_flat(x, w_fused, b_fused, half):
    """Fused VAEEncoder forward on an already-flattened activation matrix.

    x       : (N, input_dim)
    w_fused : (d_pad, out_width)   (from fuse_vae_encoder_params)
    b_fused : (1, out_width)
    Returns (z_mu, z_log_var), each (N, half), in x.dtype.
    """
    n, d = x.shape
    d_pad, out_width = w_fused.shape
    out_cols = 2 * half
    compute_dtype = w_fused.dtype
    out_dtype = x.dtype
    cbytes = jnp.dtype(compute_dtype).itemsize
    obytes = jnp.dtype(out_dtype).itemsize

    # K (input_dim) tiling — mirrors the choice made at fusion time.
    tk = d_pad if d_pad <= _K_SPLIT else _K_TILE
    k_steps = d_pad // tk

    # Cast activations to the compute dtype (bf16 by default) and pad K.
    x = x.astype(compute_dtype)
    if d_pad != d:
        x = jnp.pad(x, ((0, 0), (0, d_pad - d)))

    # ---- adaptive row tile against the VMEM data budget -------------------
    row_align = 16 if cbytes == 2 else 8           # sublane packing for bf16
    w_bufs = 1 if k_steps == 1 else 2              # W is single-buffered iff grid-invariant
    fixed = w_bufs * tk * out_width * cbytes + out_width * 4          # W + bias
    per_row = 2 * tk * cbytes + 2 * out_width * obytes + out_width * 4  # x/out dbuf + acc
    tm = (_VMEM_DATA_BUDGET - fixed) // per_row
    tm = min(_MAX_TM, max(row_align, tm))
    tm = tm // row_align * row_align

    n_min = _round_up(max(n, 1), row_align)
    tm = min(tm, n_min)
    # v7x has 2 TensorCores: make sure the "parallel" row axis has >=2 steps
    # whenever there is enough work to split.
    if tm >= n_min and n_min >= 2 * row_align:
        tm = _round_up((n_min + 1) // 2, row_align)
    n_pad = _round_up(n, tm)
    if n_pad != n:
        x = jnp.pad(x, ((0, n_pad - n), (0, 0)))

    # ---- specs -------------------------------------------------------------
    # Grid-invariant blocks don't need a second pipeline buffer.
    w_pipeline = pl.Buffered(1) if k_steps == 1 else None
    in_specs = [
        pl.BlockSpec((tm, tk), lambda i, k: (i, k)),                     # x tile
        pl.BlockSpec((tk, out_width), lambda i, k: (k, 0),
                     pipeline_mode=w_pipeline),                          # fused W
        pl.BlockSpec((1, out_width), lambda i, k: (0, 0),
                     pipeline_mode=pl.Buffered(1)),                      # fused bias
    ]
    out_spec = pl.BlockSpec((tm, out_width), lambda i, k: (i, 0))

    bytes_accessed = int(n_pad * d_pad * cbytes          # x read
                         + d_pad * out_width * cbytes    # W read
                         + out_width * 4                 # bias read
                         + n_pad * out_width * obytes)   # out write

    out = pl.pallas_call(
        _vae_encoder_kernel,
        out_shape=jax.ShapeDtypeStruct((n_pad, out_width), out_dtype),
        grid_spec=pltpu.PrefetchScalarGridSpec(
            num_scalar_prefetch=0,
            grid=(n_pad // tm, k_steps),
            in_specs=in_specs,
            out_specs=out_spec,
            scratch_shapes=[pltpu.VMEM((tm, out_width), jnp.float32)],
        ),
        compiler_params=pltpu.CompilerParams(
            dimension_semantics=("parallel", "arbitrary"),
            vmem_limit_bytes=_VMEM_LIMIT_BYTES,
        ),
        cost_estimate=pl.CostEstimate(
            flops=2 * n * d * out_cols,       # logical (unpadded) FLOPs
            transcendentals=0,
            bytes_accessed=bytes_accessed),
    )(x, w_fused, b_fused)

    z_mu = out[:n, :half]
    z_log_var = out[:n, half:out_cols]
    return z_mu, z_log_var


def vae_encoder_forward(inputs_list, w_fused, b_fused, half):
    """Mirror of VAEEncoder.forward: torch.stack + reshape(-1, D) + fused heads."""
    input_dim_pad = w_fused.shape[0]
    # The true input_dim is inferred from the inputs themselves (the fused W
    # may be K-padded); reshape flattens exactly like the PyTorch module.
    input_dim = inputs_list[0].shape[-1]
    del input_dim_pad
    x = jnp.reshape(jnp.stack(inputs_list), (-1, input_dim))
    return vae_encoder_forward_flat(x, w_fused, b_fused, half)


def init_vae_encoder_params(key, input_dim, output_dim, dtype=jnp.float32):
    """Deterministic init matching nn.Linear shapes (stored transposed)."""
    half = output_dim // 2
    k1, k2, k3, k4 = jax.random.split(key, 4)
    bound = 1.0 / jnp.sqrt(jnp.asarray(input_dim, dtype))
    w_mu = jax.random.uniform(k1, (input_dim, half), dtype, -bound, bound)
    b_mu = jax.random.uniform(k2, (half,), dtype, -bound, bound)
    w_var = jax.random.uniform(k3, (input_dim, half), dtype, -bound, bound)
    b_var = jax.random.uniform(k4, (half,), dtype, -bound, bound)
    return w_mu, b_mu, w_var, b_var


if __name__ == "__main__":
    input_dim = 32
    output_dim = 16        # fc_mu / fc_var each produce output_dim // 2 = 8
    stack_len = 2
    batch = 4              # stacked -> (2, 4, 32) -> reshape -> (8, 32)

    key = jax.random.PRNGKey(0)
    kp, kx = jax.random.split(key)
    w_mu, b_mu, w_var, b_var = init_vae_encoder_params(kp, input_dim, output_dim)

    # One-time fusion/padding/cast of the two heads (hoisted out of forward).
    w_fused, b_fused, half = fuse_vae_encoder_params(w_mu, b_mu, w_var, b_var)

    xs = [
        jax.random.normal(jax.random.fold_in(kx, i), (batch, input_dim),
                          dtype=jnp.float32)
        for i in range(stack_len)
    ]

    z_mu, z_log_var = vae_encoder_forward(xs, w_fused, b_fused, half)
    jax.block_until_ready((z_mu, z_log_var))

    assert z_mu.shape == (stack_len * batch, output_dim // 2)
    assert z_log_var.shape == (stack_len * batch, output_dim // 2)

    x_flat = jnp.reshape(jnp.stack(xs), (-1, input_dim))

    # Reference with the same bf16 rounding of x / W and f32 accumulation.
    xb = x_flat.astype(jnp.bfloat16).astype(jnp.float32)
    wmb = w_mu.astype(jnp.bfloat16).astype(jnp.float32)
    wvb = w_var.astype(jnp.bfloat16).astype(jnp.float32)
    ref_mu = jnp.maximum(xb @ wmb + b_mu, 0.0)
    ref_lv = jnp.maximum(xb @ wvb + b_var, 0.0)
    assert jnp.allclose(z_mu, ref_mu, atol=2e-4, rtol=2e-4)
    assert jnp.allclose(z_log_var, ref_lv, atol=2e-4, rtol=2e-4)

    # Sanity check against the pure-f32 semantics (loose: bf16 inputs).
    ref_mu32 = jnp.maximum(x_flat @ w_mu + b_mu, 0.0)
    ref_lv32 = jnp.maximum(x_flat @ w_var + b_var, 0.0)
    assert jnp.allclose(z_mu, ref_mu32, atol=3e-2, rtol=3e-2)
    assert jnp.allclose(z_log_var, ref_lv32, atol=3e-2, rtol=3e-2)

    print("KERNEL_OK")
</pallas_src>

<mosaic_0001>
module attributes {stable_mosaic.version = 11 : i64} {
  func.func @_vae_encoder_kernel(%arg0: i32, %arg1: i32, %arg2: memref<16x32xbf16, #tpu.memory_space<vmem>>, %arg3: memref<32x128xbf16, #tpu.memory_space<vmem>>, %arg4: memref<1x128xf32, #tpu.memory_space<vmem>>, %arg5: memref<16x128xf32, #tpu.memory_space<vmem>>, %arg6: memref<16x128xf32, #tpu.memory_space<vmem>>) attributes {dimension_semantics = [#tpu.dimension_semantics<parallel>, #tpu.dimension_semantics<arbitrary>], iteration_bounds = array<i64: 1, 1>, scalar_prefetch = 0 : i64, scratch_operands = 1 : i64, tpu.core_type = #tpu.core_type<tc>, window_params = [{transform_indices = @transform_0, window_bounds = array<i64: 16, 32>}, {pipeline_mode = #tpu.pipeline_mode<synchronous>, transform_indices = @transform_1, window_bounds = array<i64: 32, 128>}, {pipeline_mode = #tpu.pipeline_mode<synchronous>, transform_indices = @transform_2, window_bounds = array<i64: 1, 128>}, {transform_indices = @transform_3, window_bounds = array<i64: 16, 128>}]} {
    %c0_i32 = arith.constant 0 : i32
    %0 = arith.cmpi eq, %arg1, %c0_i32 : i32
    %1 = arith.extui %0 : i1 to i32
    %c0_i32_0 = arith.constant 0 : i32
    %2 = arith.cmpi ne, %1, %c0_i32_0 : i32
    scf.if %2 {
      %cst_10 = arith.constant 0.000000e+00 : f32
      %12 = vector.broadcast %cst_10 : f32 to vector<16x128xf32>
      %c0_11 = arith.constant 0 : index
      %c0_12 = arith.constant 0 : index
      %13 = vector.load %arg6[%c0_11, %c0_12] : memref<16x128xf32, #tpu.memory_space<vmem>>, vector<16x128xf32>
      tpu.vector_store %arg6[%c0_11, %c0_12], %12 {strides = array<i32>} : memref<16x128xf32, #tpu.memory_space<vmem>>, vector<16x128xf32>,
    } else {
    }
    %c0 = arith.constant 0 : index
    %c0_1 = arith.constant 0 : index
    %3 = vector.load %arg6[%c0, %c0_1] : memref<16x128xf32, #tpu.memory_space<vmem>>, vector<16x128xf32>
    %c0_2 = arith.constant 0 : index
    %c0_3 = arith.constant 0 : index
    %4 = vector.load %arg2[%c0_2, %c0_3] : memref<16x32xbf16, #tpu.memory_space<vmem>>, vector<16x32xbf16>
    %c0_4 = arith.constant 0 : index
    %c0_5 = arith.constant 0 : index
    %5 = vector.load %arg3[%c0_4, %c0_5] : memref<32x128xbf16, #tpu.memory_space<vmem>>, vector<32x128xbf16>
    %cst = arith.constant dense<0.000000e+00> : vector<16x128xf32>
    %6 = tpu.matmul %4, %5, %cst {dimension_numbers = #tpu.dot_dimension_numbers<[1], [0], [0], [1], [0, 0, 1, 1], [], []>} : vector<16x32xbf16>, vector<32x128xbf16>, vector<16x128xf32> -> vector<16x128xf32>
    %7 = arith.addf %3, %6 : vector<16x128xf32>
    %c0_6 = arith.constant 0 : index
    %c0_7 = arith.constant 0 : index
    %8 = vector.load %arg6[%c0_6, %c0_7] : memref<16x128xf32, #tpu.memory_space<vmem>>, vector<16x128xf32>
    tpu.vector_store %arg6[%c0_6, %c0_7], %7 {strides = array<i32>} : memref<16x128xf32, #tpu.memory_space<vmem>>, vector<16x128xf32>,
    %c0_i32_8 = arith.constant 0 : i32
    %9 = arith.cmpi eq, %arg1, %c0_i32_8 : i32
    %10 = arith.extui %9 : i1 to i32
    %c0_i32_9 = arith.constant 0 : i32
    %11 = arith.cmpi ne, %10, %c0_i32_9 : i32
    scf.if %11 {
      %c0_10 = arith.constant 0 : index
      %c0_11 = arith.constant 0 : index
      %12 = vector.load %arg6[%c0_10, %c0_11] : memref<16x128xf32, #tpu.memory_space<vmem>>, vector<16x128xf32>
      %c0_12 = arith.constant 0 : index
      %c0_13 = arith.constant 0 : index
      %13 = vector.load %arg4[%c0_12, %c0_13] : memref<1x128xf32, #tpu.memory_space<vmem>>, vector<1x128xf32>
      %14 = vector.broadcast %13 : vector<1x128xf32> to vector<16x128xf32>
      %15 = arith.addf %12, %14 : vector<16x128xf32>
      %cst_14 = arith.constant 0.000000e+00 : f32
      %16 = vector.broadcast %cst_14 : f32 to vector<16x128xf32>
      %17 = arith.maximumf %15, %16 : vector<16x128xf32>
      %c0_15 = arith.constant 0 : index
      %c0_16 = arith.constant 0 : index
      %18 = vector.load %arg5[%c0_15, %c0_16] : memref<16x128xf32, #tpu.memory_space<vmem>>, vector<16x128xf32>
      tpu.vector_store %arg5[%c0_15, %c0_16], %17 {strides = array<i32>} : memref<16x128xf32, #tpu.memory_space<vmem>>, vector<16x128xf32>,
    } else {
    }
    return
  }
  func.func @transform_0(%arg0: i32, %arg1: i32) -> (i32, i32) {
    %c0_i32 = arith.constant 0 : i32
    return %arg0, %arg1 : i32, i32
  }
  func.func @transform_1(%arg0: i32, %arg1: i32) -> (i32, i32) {
    %c0_i32 = arith.constant 0 : i32
    %c0_i32_0 = arith.constant 0 : i32
    return %arg1, %c0_i32 : i32, i32
  }
  func.func @transform_2(%arg0: i32, %arg1: i32) -> (i32, i32) {
    %c0_i32 = arith.constant 0 : i32
    %c0_i32_0 = arith.constant 0 : i32
    %c0_i32_1 = arith.constant 0 : i32
    return %c0_i32, %c0_i32_0 : i32, i32
  }
  func.func @transform_3(%arg0: i32, %arg1: i32) -> (i32, i32) {
    %c0_i32 = arith.constant 0 : i32
    %c0_i32_0 = arith.constant 0 : i32
    return %arg0, %c0_i32 : i32, i32
  }
}

</mosaic_0001>

<llo_original>
// kernel: tpu_custom_call.1
$region0: #{tpu_custom_call.1}
  #allocation0 [shape = 'u32[]', space=smem, size = 0x4, offset = 0x4, fixed_abs, tag = 'smem constant byte address 0x4 - core index']
  #allocation1 [shape = 'u32[72,128]{1,0:T(1,128)}', space=vmem, size = 0x9000, scoped, tag = 'internal scratch']
  #allocation2 [shape = 'f32[16,128]{1,0:T(8,128)}', space=vmem, size = 0x2000, scoped, tag = 'scratch operand']
  %s0 = inlined_call_operand.hbm [shape: bf16[16,32], index: 0, kind: input, shape index: {}]
  %s1 = inlined_call_operand.hbm [shape: bf16[32,128], index: 1, kind: input, shape index: {}]
  %s2 = inlined_call_operand.vmem [shape: f32[1,128], index: 2, kind: input, shape index: {}]
  %s3 = inlined_call_operand.hbm [shape: f32[16,128], index: 3, kind: output, shape index: {}]
  %s4 = sld [smem:[#allocation0]]
  $region38: #{tpu_custom_call.1} parent=0
    _
  %s6 = ssub.s32 1, %s4
  %s7 = scalar_select 0, %s6, %s4
  $region1: #{tpu_custom_call.1} parent=0
    #allocation3 [shape = 'u8[4096]{0}', space=vmem, size = 0x1000, scoped, tag = 'input window, operand 0, single buffered']
    #allocation4 [shape = 's32[1]{0}', space=sflag, size = 0x4, scoped, tag = 'scoped memory for tpu_custom_call.1']
    #allocation5 [shape = 's32[1]{0}', space=sflag, size = 0x4, scoped, tag = 'scoped memory for tpu_custom_call.1']
    #allocation6 [shape = 'u8[8192]{0}', space=vmem, size = 0x2000, scoped, tag = 'input window, operand 1, single buffered']
    #allocation7 [shape = 's32[1]{0}', space=sflag, size = 0x4, scoped, tag = 'scoped memory for tpu_custom_call.1']
    #allocation8 [shape = 'u8[8192]{0}', space=vmem, size = 0x2000, scoped, tag = 'output window, operand 0, single buffered']
    %8 = vsyncpa [#allocation4], 0
    %9 = vsyncpa [#allocation7], 0
    %10 = vsyncpa [#allocation5], 0
    // Predicated region
    $region2: #{tpu_custom_call.1} parent=1 // pred_check
      _
    $region3: #{tpu_custom_call.1} parent=1 // pred_check_branch
      %12 = sbr.rel (0) target = $region5
    $region4: #{tpu_custom_call.1} parent=1 // pred_region
      %14 = vsyncadd [#allocation4], 0
      %s15 = sshll.u32 %s0, 4
      %s16 = int_to_ptr.hbm [resolvable:$true] %s15
      %s17 = sshll.u32 [#allocation3], 4
      %s18 = int_to_ptr.vmem [resolvable:$true] %s17
      %23 = dma.hbm_to_vmem [thread:$0]  %s16, 128, %s18, [#allocation4], 64, 64, 4
    $region5: #{tpu_custom_call.1} parent=1 // pred_fallthru
      _
    // Predicated region
    $region6: #{tpu_custom_call.1} parent=1 // pred_check
      _
    $region7: #{tpu_custom_call.1} parent=1 // pred_check_branch
      %25 = sbr.rel (0) target = $region9
    $region8: #{tpu_custom_call.1} parent=1 // pred_region
      %27 = vsyncadd [#allocation7], 0
      %s28 = sshll.u32 %s1, 4
      %s29 = int_to_ptr.hbm [resolvable:$true] %s28
      %s30 = sshll.u32 [#allocation6], 4
      %s31 = int_to_ptr.vmem [resolvable:$true] %s30
      %36 = dma.hbm_to_vmem [thread:$0]  %s29, 256, %s31, [#allocation7], 64, 64, 4
    $region9: #{tpu_custom_call.1} parent=1 // pred_fallthru
      _
    // Predicated region
    $region10: #{tpu_custom_call.1} parent=1 // pred_check
      _
    $region11: #{tpu_custom_call.1} parent=1 // pred_check_branch
      %38 = sbr.rel (0) target = $region13
    $region12: #{tpu_custom_call.1} parent=1 // pred_region
      _
    $region13: #{tpu_custom_call.1} parent=1 // pred_fallthru
      _
    // Predicated region
    $region14: #{tpu_custom_call.1} parent=1 // pred_check
      _
    $region15: #{tpu_custom_call.1} parent=1 // pred_check_branch
      %40 = sbr.rel (0) target = $region17
    $region16: #{tpu_custom_call.1} parent=1 // pred_region
      %42 = dma.done [#allocation4], 128
    $region17: #{tpu_custom_call.1} parent=1 // pred_fallthru
      _
    // Predicated region
    $region18: #{tpu_custom_call.1} parent=1 // pred_check
      _
    $region19: #{tpu_custom_call.1} parent=1 // pred_check_branch
      %44 = sbr.rel (0) target = $region21
    $region20: #{tpu_custom_call.1} parent=1 // pred_region
      %46 = dma.done [#allocation7], 256
    $region21: #{tpu_custom_call.1} parent=1 // pred_fallthru
      _
    %p48 = scmp.eq.s32.totalorder 0, 0
    // Predicated region
    $region22: #{tpu_custom_call.1} parent=1 // pred_check
      %p49 = pneg %p48
    $region23: #{tpu_custom_call.1} parent=1 // pred_check_branch
      %51 = sbr.rel (%p49) target = $region25
    $region24: #{tpu_custom_call.1} parent=1 // pred_region
      %52 = vst [vmem:[#allocation2] sm:$0xff] 0.0
      %53 = vst [vmem:[#allocation2 + $0x8] sm:$0xff] 0.0
    $region25: #{tpu_custom_call.1} parent=1 // pred_fallthru
      _
    %v54 = vld [vmem:[#allocation2] sm:$0xff]
    %v55 = vld [vmem:[#allocation2 + $0x8] sm:$0xff]
    %v56 = vld [vmem:[#allocation3] sm:$0xf]
    %v57 = vld [vmem:[#allocation3 + $0x4] sm:$0xf]
    %v58 = vld [vmem:[#allocation6] sm:$0xf]
    %v59 = vld [vmem:[#allocation6 + $0x4] sm:$0xf]
    %v60 = vld [vmem:[#allocation6 + $0x8] sm:$0xf]
    %v61 = vld [vmem:[#allocation6 + $0xc] sm:$0xf]
    %v64 = vunpack.c.l.b16 %v56
    %v65 = vunpack.c.l.b16 %v57
    %v66 = vpack.c.b16 %v65, %v64
    %v71 = vunpack.c.l.b16 %v58
    %v72 = vunpack.c.l.b16 %v59
    %v73 = vunpack.c.l.b16 %v60
    %v74 = vunpack.c.l.b16 %v61
    %v75 = vpack.c.b16 %v72, %v71
    %v76 = vpack.c.b16 %v74, %v73
    %vm79 = vcmask 261120
    %v81 = vsel %vm79, %v66, 0
    %83 = vmatpush.bf16.msra.mxu0 0
    %84 = vmatpush.bf16.msra.mxu0 0
    %85 = vmatpush.bf16.msra.mxu0 0
    %86 = vmatpush.bf16.msra.mxu0 0
    %87 = vmatpush.bf16.msra.mxu0 0
    %88 = vmatpush.bf16.msra.mxu0 0
    %89 = vmatpush.bf16.msra.mxu0 %v76
    %90 = vmatpush.bf16.msra.mxu0 %v75
    %91 = vmatmul.bf16.gmra.mxu0 %v81
    %v92 = vpop.f32.mrf.mxu0
    %v93 = vadd.f32 0.0, %v92
    %v94 = vpop.f32.mrf.mxu0
    %v95 = vadd.f32 0.0, %v94
    %96 = vdwg.mxu0
    %v97 = vadd.f32 %v54, %v93
    %v98 = vadd.f32 %v55, %v95
    %99 = vst [vmem:[#allocation2] sm:$0xff] %v97
    %100 = vst [vmem:[#allocation2 + $0x8] sm:$0xff] %v98
    // Predicated region
    $region26: #{tpu_custom_call.1} parent=1 // pred_check
      %p101 = pneg %p48
    $region27: #{tpu_custom_call.1} parent=1 // pred_check_branch
      %103 = sbr.rel (%p101) target = $region29
    $region28: #{tpu_custom_call.1} parent=1 // pred_region
      %v104 = vld [vmem:[#allocation2] sm:$0xff]
      %v105 = vld [vmem:[#allocation2 + $0x8] sm:$0xff]
      %v106 = vld [vmem:[%s2] sm:$0x1]
      %v108 = vperm.slane %v106, 0
      %v110 = vadd.f32 %v104, %v108
      %v111 = vadd.f32 %v105, %v108
      %v112 = vmax.f32 %v110, 0.0
      %v113 = vmax.f32 %v111, 0.0
      %114 = vst [vmem:[#allocation8] sm:$0xff] %v112
      %115 = vst [vmem:[#allocation8 + $0x8] sm:$0xff] %v113
    $region29: #{tpu_custom_call.1} parent=1 // pred_fallthru
      _
    // Predicated region
    $region30: #{tpu_custom_call.1} parent=1 // pred_check
      _
    $region31: #{tpu_custom_call.1} parent=1 // pred_check_branch
      %117 = sbr.rel (0) target = $region33
    $region32: #{tpu_custom_call.1} parent=1 // pred_region
      %119 = vsyncadd [#allocation5], 0
      %s120 = sshll.u32 [#allocation8], 4
      %s121 = int_to_ptr.vmem [resolvable:$true] %s120
      %s122 = sshll.u32 %s3, 4
      %s123 = int_to_ptr.hbm [resolvable:$true] %s122
      %128 = dma.vmem_to_hbm [thread:$0]  %s121, 256, %s123, [#allocation5], 128, 128, 8
    $region33: #{tpu_custom_call.1} parent=1 // pred_fallthru
      _
    // Predicated region
    $region34: #{tpu_custom_call.1} parent=1 // pred_check
      _
    $region35: #{tpu_custom_call.1} parent=1 // pred_check_branch
      %130 = sbr.rel (0) target = $region37
    $region36: #{tpu_custom_call.1} parent=1 // pred_region
      %132 = dma.done [#allocation5], 256
    $region37: #{tpu_custom_call.1} parent=1 // pred_fallthru
      _
    %133 = vsyncpa [#allocation4], 1
    %134 = vsyncpa [#allocation7], 1
    %135 = vsyncpa [#allocation5], 1

</llo_original>
